<compile_context>
chip_gen: v6e
topology: v6e:2x2x1
jax: 0.10.0
libtpu: 0.0.40
codegen_flags: <defaults>
</compile_context>

<pallas_src>
from collections import namedtuple

import jax
import jax.numpy as jnp
from jax.experimental import pallas as pl
from jax.experimental.pallas import tpu as pltpu

Outputs = namedtuple("Outputs", ["action", "value", "max_a", "max_q", "qvals"])

_LANE = 128


def _round_up(x, m):
    return ((x + m - 1) // m) * m


def _qfunc_kernel(ob_ref, w1_ref, b1_ref, w2_ref, b2_ref, qvals_ref):
    # hidden = relu(ob @ W1 + b1);  qvals = hidden @ W2 + b2
    # Matmul operands in bf16 (MXU), accumulation + elementwise in f32 (VPU).
    ob = ob_ref[...].astype(jnp.bfloat16)
    h = jnp.dot(ob, w1_ref[...], preferred_element_type=jnp.float32)
    h = jnp.maximum(h + b1_ref[...], 0.0)
    q = jnp.dot(h.astype(jnp.bfloat16), w2_ref[...],
                preferred_element_type=jnp.float32)
    qvals_ref[...] = q + b2_ref[...]


def _vmem_working_set(tb, obs_dim, hidden, num_actions, ob_itemsize):
    """(8,128)-padding-aware VMEM estimate for one grid step (bytes)."""
    ob_row = _round_up(obs_dim, _LANE)
    h_row = _round_up(hidden, _LANE)
    q_row = _round_up(num_actions, _LANE)
    per_row = (2 * ob_row * ob_itemsize   # double-buffered ob input tiles
               + ob_row * 2               # in-kernel bf16 copy of ob tile
               + h_row * 4 + h_row * 2    # hidden f32 + hidden bf16
               + 2 * q_row * 4)           # double-buffered qvals output tiles
    params = (2 * (_round_up(obs_dim, 16) * _round_up(hidden, _LANE) * 2
                   + _round_up(hidden, 16) * _round_up(num_actions, _LANE) * 2)
              + 2 * 8 * (_round_up(hidden, _LANE)
                         + _round_up(num_actions, _LANE)) * 4)
    return tb * per_row + params


def qfunction_base_pallas(ob, w1, b1, w2, b2, *, block_b=8192):
    """Fused MLP base. Returns qvals (B, num_actions) in f32."""
    ob = jnp.asarray(ob)                       # keep caller dtype (bf16 OK)
    B, obs_dim = ob.shape
    hidden = w1.shape[1]
    num_actions = w2.shape[1]

    # Weights in bf16 (one-time cast, VMEM-resident); biases stay f32.
    w1 = jnp.asarray(w1, jnp.bfloat16)
    w2 = jnp.asarray(w2, jnp.bfloat16)
    b1 = jnp.asarray(b1, jnp.float32).reshape(1, hidden)
    b2 = jnp.asarray(b2, jnp.float32).reshape(1, num_actions)

    ob_itemsize = jnp.dtype(ob.dtype).itemsize
    # sublane multiple: 8 for 32-bit, 16 for packed 16-bit inputs
    tile_mult = 8 if ob_itemsize >= 4 else 16

    # Physical VMEM of this generation (64 MiB/TC on v7x, 128 MiB on v5e/v6e).
    try:
        info = pltpu.get_tpu_info()
        vmem_phys = int(getattr(info, "vmem_capacity_bytes", 64 << 20))
    except Exception:  # pragma: no cover - conservative fallback
        vmem_phys = 64 << 20
    ws_cap = min(vmem_phys * 3 // 4, 96 << 20)        # working-set budget

    # Batch tile: multiple of the sublane tile, shrunk until it fits VMEM.
    TB = min(_round_up(block_b, tile_mult), _round_up(B, tile_mult))
    TB = max(TB, tile_mult)
    while (_vmem_working_set(TB, obs_dim, hidden, num_actions, ob_itemsize)
           > ws_cap and TB > tile_mult):
        TB = max(_round_up(TB // 2, tile_mult), tile_mult)

    ws = _vmem_working_set(TB, obs_dim, hidden, num_actions, ob_itemsize)
    vmem_bytes = int(min(max(2 * ws, 16 << 20), vmem_phys - (8 << 20)))

    n_blocks = pl.cdiv(B, TB)

    qvals = pl.pallas_call(
        _qfunc_kernel,
        out_shape=jax.ShapeDtypeStruct((B, num_actions), jnp.float32),
        grid=(n_blocks,),
        in_specs=[
            pl.BlockSpec((TB, obs_dim), lambda i: (i, 0)),        # ob tile
            pl.BlockSpec((obs_dim, hidden), lambda i: (0, 0)),    # W1 (resident)
            pl.BlockSpec((1, hidden), lambda i: (0, 0)),          # b1 (resident)
            pl.BlockSpec((hidden, num_actions), lambda i: (0, 0)),  # W2
            pl.BlockSpec((1, num_actions), lambda i: (0, 0)),     # b2
        ],
        out_specs=pl.BlockSpec((TB, num_actions), lambda i: (i, 0)),
        compiler_params=pltpu.CompilerParams(
            dimension_semantics=("parallel",),
            vmem_limit_bytes=vmem_bytes,
        ),
    )(ob, w1, b1, w2, b2)

    return qvals


def qfunction_forward(ob, params, action=None):
    """Mirror of QFunction.forward for a discrete-action base."""
    w1, b1, w2, b2 = params
    qvals = qfunction_base_pallas(ob, w1, b1, w2, b2)

    # max / argmax over the (tiny) action axis done in the wrapper; XLA fuses
    # this (B, A) reduction for free and keeping it out of the kernel avoids
    # two extra narrow output DMAs + XLU reductions per grid step.
    # jnp.argmax matches torch .max(dim=-1) first-occurrence tie-breaking
    # (torch does not formally guarantee it, so tie parity is best-effort).
    maxq = jnp.max(qvals, axis=-1)
    maxa = jnp.argmax(qvals, axis=-1).astype(jnp.int32)

    if action is None:
        return Outputs(action=maxa, value=maxq, max_a=maxa, max_q=maxq,
                       qvals=qvals)

    # discrete branch with a provided action: value = qvals.gather(1, action)
    if action.ndim == 1:
        action_col = action.astype(jnp.int32)[:, None]
    else:
        action_col = action.astype(jnp.int32)
    value = jnp.take_along_axis(qvals, action_col, axis=1)[:, 0]
    return Outputs(action=action_col[:, 0], value=value,
                   max_a=maxa, max_q=maxq, qvals=qvals)
    # TODO(synk): continuous-action branch (ContinuousQFunctionBase) not
    # implemented since that base network is unspecified; discrete path only.


def init_params(key, obs_dim, hidden, num_actions):
    k1, k2 = jax.random.split(key)
    w1 = jax.random.normal(k1, (obs_dim, hidden), jnp.float32) * 0.1
    b1 = jnp.zeros((1, hidden), jnp.float32)
    w2 = jax.random.normal(k2, (hidden, num_actions), jnp.float32) * 0.1
    b2 = jnp.zeros((1, num_actions), jnp.float32)
    return w1, b1, w2, b2


def _reference_qvals(ob, params):
    """Pure-JAX reference matching the kernel's bf16-matmul / f32-accum path."""
    w1, b1, w2, b2 = params
    h = jnp.dot(ob.astype(jnp.bfloat16), w1.astype(jnp.bfloat16),
                preferred_element_type=jnp.float32) + b1
    h = jnp.maximum(h, 0.0)
    q = jnp.dot(h.astype(jnp.bfloat16), w2.astype(jnp.bfloat16),
                preferred_element_type=jnp.float32) + b2
    return q


if __name__ == "__main__":
    B, OBS_DIM, HIDDEN, NUM_ACTIONS = 8, 32, 64, 8

    key = jax.random.PRNGKey(0)
    k_ob, k_param, k_act, k_ob2 = jax.random.split(key, 4)

    ob = jax.random.normal(k_ob, (B, OBS_DIM), jnp.float32)
    params = init_params(k_param, OBS_DIM, HIDDEN, NUM_ACTIONS)
    action = jax.random.randint(k_act, (B,), 0, NUM_ACTIONS, jnp.int32)

    # action=None path (greedy)
    out_greedy = qfunction_forward(ob, params, action=None)
    # provided-action path
    out_act = qfunction_forward(ob, params, action=action)

    jax.block_until_ready((out_greedy.qvals, out_greedy.value, out_greedy.max_a,
                           out_act.value, out_act.action))

    # sanity check against pure-JAX reference (same bf16 matmul path)
    q_ref = _reference_qvals(ob, params)
    assert jnp.allclose(out_greedy.qvals, q_ref, atol=2e-3, rtol=2e-3)
    assert jnp.allclose(out_greedy.max_q, q_ref.max(axis=-1), atol=2e-3)
    assert jnp.array_equal(out_greedy.max_a,
                           q_ref.argmax(axis=-1).astype(jnp.int32))
    assert jnp.allclose(
        out_act.value,
        jnp.take_along_axis(q_ref, action[:, None], axis=1)[:, 0],
        atol=2e-3)

    # exercise the partial-last-block path (B not a multiple of the tile),
    # now handled without any whole-batch padding copy.
    B2 = 300
    w1, b1, w2, b2 = params
    ob2 = jax.random.normal(k_ob2, (B2, OBS_DIM), jnp.float32)
    q2 = qfunction_base_pallas(ob2, w1, b1, w2, b2, block_b=128)
    jax.block_until_ready(q2)
    q2_ref = _reference_qvals(ob2, params)
    assert q2.shape == (B2, NUM_ACTIONS)
    assert jnp.allclose(q2, q2_ref, atol=2e-3, rtol=2e-3)

    # exercise bf16 observation pass-through (halves the dominant HBM read)
    ob2_bf16 = ob2.astype(jnp.bfloat16)
    q3 = qfunction_base_pallas(ob2_bf16, w1, b1, w2, b2, block_b=128)
    jax.block_until_ready(q3)
    q3_ref = _reference_qvals(ob2_bf16, params)
    assert jnp.allclose(q3, q3_ref, atol=2e-3, rtol=2e-3)

    print("KERNEL_OK")
</pallas_src>

<mosaic_0001>
module attributes {stable_mosaic.version = 11 : i64} {
  func.func @_qfunc_kernel(%arg0: i32, %arg1: memref<8x32xf32, #tpu.memory_space<vmem>>, %arg2: memref<32x64xbf16, #tpu.memory_space<vmem>>, %arg3: memref<1x64xf32, #tpu.memory_space<vmem>>, %arg4: memref<64x8xbf16, #tpu.memory_space<vmem>>, %arg5: memref<1x8xf32, #tpu.memory_space<vmem>>, %arg6: memref<8x8xf32, #tpu.memory_space<vmem>>) attributes {dimension_semantics = [#tpu.dimension_semantics<parallel>], iteration_bounds = array<i64: 1>, scalar_prefetch = 0 : i64, scratch_operands = 0 : i64, tpu.core_type = #tpu.core_type<tc>, window_params = [{transform_indices = @transform_0, window_bounds = array<i64: 8, 32>}, {pipeline_mode = #tpu.pipeline_mode<synchronous>, transform_indices = @transform_1, window_bounds = array<i64: 32, 64>}, {pipeline_mode = #tpu.pipeline_mode<synchronous>, transform_indices = @transform_2, window_bounds = array<i64: 1, 64>}, {pipeline_mode = #tpu.pipeline_mode<synchronous>, transform_indices = @transform_3, window_bounds = array<i64: 64, 8>}, {pipeline_mode = #tpu.pipeline_mode<synchronous>, transform_indices = @transform_4, window_bounds = array<i64: 1, 8>}, {transform_indices = @transform_5, window_bounds = array<i64: 8, 8>}]} {
    %c0 = arith.constant 0 : index
    %c0_0 = arith.constant 0 : index
    %0 = vector.load %arg1[%c0, %c0_0] : memref<8x32xf32, #tpu.memory_space<vmem>>, vector<8x32xf32>
    %1 = arith.truncf %0 : vector<8x32xf32> to vector<8x32xbf16>
    %c0_1 = arith.constant 0 : index
    %c0_2 = arith.constant 0 : index
    %2 = vector.load %arg2[%c0_1, %c0_2] : memref<32x64xbf16, #tpu.memory_space<vmem>>, vector<32x64xbf16>
    %cst = arith.constant dense<0.000000e+00> : vector<8x64xf32>
    %3 = tpu.matmul %1, %2, %cst {dimension_numbers = #tpu.dot_dimension_numbers<[1], [0], [0], [1], [0, 0, 1, 1], [], []>} : vector<8x32xbf16>, vector<32x64xbf16>, vector<8x64xf32> -> vector<8x64xf32>
    %c0_3 = arith.constant 0 : index
    %c0_4 = arith.constant 0 : index
    %4 = vector.load %arg3[%c0_3, %c0_4] : memref<1x64xf32, #tpu.memory_space<vmem>>, vector<1x64xf32>
    %5 = vector.broadcast %4 : vector<1x64xf32> to vector<8x64xf32>
    %6 = arith.addf %3, %5 : vector<8x64xf32>
    %cst_5 = arith.constant 0.000000e+00 : f32
    %7 = vector.broadcast %cst_5 : f32 to vector<8x64xf32>
    %8 = arith.maximumf %6, %7 : vector<8x64xf32>
    %9 = arith.truncf %8 : vector<8x64xf32> to vector<8x64xbf16>
    %c0_6 = arith.constant 0 : index
    %c0_7 = arith.constant 0 : index
    %10 = vector.load %arg4[%c0_6, %c0_7] : memref<64x8xbf16, #tpu.memory_space<vmem>>, vector<64x8xbf16>
    %cst_8 = arith.constant dense<0.000000e+00> : vector<8x8xf32>
    %11 = tpu.matmul %9, %10, %cst_8 {dimension_numbers = #tpu.dot_dimension_numbers<[1], [0], [0], [1], [0, 0, 1, 1], [], []>} : vector<8x64xbf16>, vector<64x8xbf16>, vector<8x8xf32> -> vector<8x8xf32>
    %c0_9 = arith.constant 0 : index
    %c0_10 = arith.constant 0 : index
    %12 = vector.load %arg5[%c0_9, %c0_10] : memref<1x8xf32, #tpu.memory_space<vmem>>, vector<1x8xf32>
    %13 = vector.broadcast %12 : vector<1x8xf32> to vector<8x8xf32>
    %14 = arith.addf %11, %13 : vector<8x8xf32>
    %c0_11 = arith.constant 0 : index
    %c0_12 = arith.constant 0 : index
    %15 = vector.load %arg6[%c0_11, %c0_12] : memref<8x8xf32, #tpu.memory_space<vmem>>, vector<8x8xf32>
    tpu.vector_store %arg6[%c0_11, %c0_12], %14 {strides = array<i32>} : memref<8x8xf32, #tpu.memory_space<vmem>>, vector<8x8xf32>,
    return
  }
  func.func @transform_0(%arg0: i32) -> (i32, i32) {
    %c0_i32 = arith.constant 0 : i32
    %c0_i32_0 = arith.constant 0 : i32
    return %arg0, %c0_i32 : i32, i32
  }
  func.func @transform_1(%arg0: i32) -> (i32, i32) {
    %c0_i32 = arith.constant 0 : i32
    %c0_i32_0 = arith.constant 0 : i32
    %c0_i32_1 = arith.constant 0 : i32
    return %c0_i32, %c0_i32_0 : i32, i32
  }
  func.func @transform_2(%arg0: i32) -> (i32, i32) {
    %c0_i32 = arith.constant 0 : i32
    %c0_i32_0 = arith.constant 0 : i32
    %c0_i32_1 = arith.constant 0 : i32
    return %c0_i32, %c0_i32_0 : i32, i32
  }
  func.func @transform_3(%arg0: i32) -> (i32, i32) {
    %c0_i32 = arith.constant 0 : i32
    %c0_i32_0 = arith.constant 0 : i32
    %c0_i32_1 = arith.constant 0 : i32
    return %c0_i32, %c0_i32_0 : i32, i32
  }
  func.func @transform_4(%arg0: i32) -> (i32, i32) {
    %c0_i32 = arith.constant 0 : i32
    %c0_i32_0 = arith.constant 0 : i32
    %c0_i32_1 = arith.constant 0 : i32
    return %c0_i32, %c0_i32_0 : i32, i32
  }
  func.func @transform_5(%arg0: i32) -> (i32, i32) {
    %c0_i32 = arith.constant 0 : i32
    %c0_i32_0 = arith.constant 0 : i32
    return %arg0, %c0_i32 : i32, i32
  }
}

</mosaic_0001>

<llo_original>
// kernel: tpu_custom_call.1
$region0: #{tpu_custom_call.1}
  #allocation0 [shape = 'u32[]', space=smem, size = 0x4, offset = 0x4, fixed_abs, tag = 'smem constant byte address 0x4 - core index']
  #allocation1 [shape = 'u32[144,128]{1,0:T(1,128)}', space=vmem, size = 0x12000, scoped, tag = 'internal scratch']
  %s0 = inlined_call_operand.vmem [shape: f32[8,32], index: 0, kind: input, shape index: {}]
  %s1 = inlined_call_operand.vmem [shape: bf16[32,64], index: 1, kind: input, shape index: {}]
  %s2 = inlined_call_operand.vmem [shape: f32[1,64], index: 2, kind: input, shape index: {}]
  %s3 = inlined_call_operand.vmem [shape: bf16[64,8], index: 3, kind: input, shape index: {}]
  %s4 = inlined_call_operand.vmem [shape: f32[1,8], index: 4, kind: input, shape index: {}]
  %s5 = inlined_call_operand.hbm [shape: f32[8,8], index: 5, kind: output, shape index: {}]
  %s6 = sld [smem:[#allocation0]]
  $region30: #{tpu_custom_call.1} parent=0
    _
  %s8 = ssub.s32 1, %s6
  %s9 = scalar_select 0, %s8, %s6
  $region1: #{tpu_custom_call.1} parent=0
    #allocation2 [shape = 'u8[4096]{0}', space=vmem, size = 0x1000, scoped, tag = 'output window, operand 0, single buffered']
    #allocation3 [shape = 's32[1]{0}', space=sflag, size = 0x4, scoped, tag = 'scoped memory for tpu_custom_call.1']
    %10 = vsyncpa [#allocation3], 0
    // Predicated region
    $region2: #{tpu_custom_call.1} parent=1 // pred_check
      _
    $region3: #{tpu_custom_call.1} parent=1 // pred_check_branch
      %12 = sbr.rel (0) target = $region5
    $region4: #{tpu_custom_call.1} parent=1 // pred_region
      _
    $region5: #{tpu_custom_call.1} parent=1 // pred_fallthru
      _
    // Predicated region
    $region6: #{tpu_custom_call.1} parent=1 // pred_check
      _
    $region7: #{tpu_custom_call.1} parent=1 // pred_check_branch
      %14 = sbr.rel (0) target = $region9
    $region8: #{tpu_custom_call.1} parent=1 // pred_region
      _
    $region9: #{tpu_custom_call.1} parent=1 // pred_fallthru
      _
    // Predicated region
    $region10: #{tpu_custom_call.1} parent=1 // pred_check
      _
    $region11: #{tpu_custom_call.1} parent=1 // pred_check_branch
      %16 = sbr.rel (0) target = $region13
    $region12: #{tpu_custom_call.1} parent=1 // pred_region
      _
    $region13: #{tpu_custom_call.1} parent=1 // pred_fallthru
      _
    // Predicated region
    $region14: #{tpu_custom_call.1} parent=1 // pred_check
      _
    $region15: #{tpu_custom_call.1} parent=1 // pred_check_branch
      %18 = sbr.rel (0) target = $region17
    $region16: #{tpu_custom_call.1} parent=1 // pred_region
      _
    $region17: #{tpu_custom_call.1} parent=1 // pred_fallthru
      _
    // Predicated region
    $region18: #{tpu_custom_call.1} parent=1 // pred_check
      _
    $region19: #{tpu_custom_call.1} parent=1 // pred_check_branch
      %20 = sbr.rel (0) target = $region21
    $region20: #{tpu_custom_call.1} parent=1 // pred_region
      _
    $region21: #{tpu_custom_call.1} parent=1 // pred_fallthru
      _
    %v22 = vld [vmem:[%s0] sm:$0xff]
    %v23 = vpack.c.bf16 %v22, %v22
    %v24 = vld [vmem:[%s1] sm:$0xf]
    %v25 = vld [vmem:[%s1 + $0x4] sm:$0xf]
    %v26 = vld [vmem:[%s1 + $0x8] sm:$0xf]
    %v27 = vld [vmem:[%s1 + $0xc] sm:$0xf]
    %v28 = vld [vmem:[%s2] sm:$0x1]
    %v30 = vlaneseq
    %v31 = vshrl.u32 %v30, 7
    %v32 = vsub.s32 0, %v31
    %v33 = vrot.slane %v28, %v32
    %v39 = vunpack.c.l.b16 %v24
    %v40 = vunpack.c.l.b16 %v25
    %v41 = vunpack.c.l.b16 %v26
    %v42 = vunpack.c.l.b16 %v27
    %v43 = vpack.c.b16 %v40, %v39
    %v44 = vpack.c.b16 %v42, %v41
    %vm47 = vcmask 261120
    %v49 = vsel %vm47, %v23, 0
    %51 = vmatprep.subr.bf16.mxu0 0
    %52 = vmatpush1.bf16.msra.mxu0 0
    %53 = vmatprep.subr.bf16.mxu0 0
    %54 = vmatpush1.bf16.msra.mxu0 0
    %55 = vmatprep.subr.bf16.mxu0 0
    %56 = vmatpush1.bf16.msra.mxu0 0
    %57 = vmatprep.subr.bf16.mxu0 0
    %58 = vmatpush1.bf16.msra.mxu0 0
    %59 = vmatprep.subr.bf16.mxu0 0
    %60 = vmatpush1.bf16.msra.mxu0 0
    %61 = vmatprep.subr.bf16.mxu0 0
    %62 = vmatpush1.bf16.msra.mxu0 0
    %63 = vmatprep.subr.bf16.mxu0 0
    %64 = vmatpush1.bf16.msra.mxu0 %v44
    %65 = vmatprep.subr.bf16.mxu0 0
    %66 = vmatpush1.bf16.msra.mxu0 %v43
    %67 = vmatprep.subr.bf16.mxu0 0
    %68 = vmatpush2.bf16.msra.mxu0 0
    %69 = vmatprep.subr.bf16.mxu0 0
    %70 = vmatpush2.bf16.msra.mxu0 0
    %71 = vmatprep.subr.bf16.mxu0 0
    %72 = vmatpush2.bf16.msra.mxu0 0
    %73 = vmatprep.subr.bf16.mxu0 0
    %74 = vmatpush2.bf16.msra.mxu0 0
    %75 = vmatprep.subr.bf16.mxu0 0
    %76 = vmatpush2.bf16.msra.mxu0 0
    %77 = vmatprep.subr.bf16.mxu0 0
    %78 = vmatpush2.bf16.msra.mxu0 0
    %79 = vmatprep.subr.bf16.mxu0 0
    %80 = vmatpush2.bf16.msra.mxu0 0
    %81 = vmatprep.subr.bf16.mxu0 0
    %82 = vmatpush2.bf16.msra.mxu0 0
    %83 = vmatprep.mubr.bf16.mxu0 0
    %84 = vmatmul.mubr.bf16.gmra.mxu0 %v49
    %v85 = vpop.f32.mrf.mxu0
    %v86 = vadd.f32 %v33, %v85
    %v87 = vpop.f32.mrf.mxu0
    %v88 = vpop.f32.mrf.mxu0
    %v89 = vpop.f32.mrf.mxu0
    %90 = vdwg.mxu0
    %v91 = vmax.f32 %v86, 0.0
    %v92 = vpack.c.bf16 %v91, %v91
    %v93 = vld [vmem:[%s3] sm:$0xf]
    %v94 = vld [vmem:[%s3 + $0x4] sm:$0xf]
    %v95 = vld [vmem:[%s3 + $0x8] sm:$0xf]
    %v96 = vld [vmem:[%s3 + $0xc] sm:$0xf]
    %v97 = vld [vmem:[%s3 + $0x10] sm:$0xf]
    %v98 = vld [vmem:[%s3 + $0x14] sm:$0xf]
    %v99 = vld [vmem:[%s3 + $0x18] sm:$0xf]
    %v100 = vld [vmem:[%s3 + $0x1c] sm:$0xf]
    %v101 = vld [vmem:[%s4] sm:$0x1]
    %v103 = vlaneseq
    %v104 = vshrl.u32 %v103, 7
    %v105 = vsub.s32 0, %v104
    %v106 = vrot.slane %v101, %v105
    %v116 = vunpack.c.l.b16 %v93
    %v117 = vunpack.c.l.b16 %v94
    %v118 = vunpack.c.l.b16 %v95
    %v119 = vunpack.c.l.b16 %v96
    %v120 = vunpack.c.l.b16 %v97
    %v121 = vunpack.c.l.b16 %v98
    %v122 = vunpack.c.l.b16 %v99
    %v123 = vunpack.c.l.b16 %v100
    %v124 = vpack.c.b16 %v117, %v116
    %v125 = vpack.c.b16 %v119, %v118
    %v126 = vpack.c.b16 %v121, %v120
    %v127 = vpack.c.b16 %v123, %v122
    %vm132 = vcmask 523264
    %v134 = vsel %vm132, %v92, 0
    %136 = vmatprep.subr.bf16.mxu0 0
    %137 = vmatpush1.bf16.msra.mxu0 0
    %138 = vmatprep.subr.bf16.mxu0 0
    %139 = vmatpush1.bf16.msra.mxu0 0
    %140 = vmatprep.subr.bf16.mxu0 0
    %141 = vmatpush1.bf16.msra.mxu0 0
    %142 = vmatprep.subr.bf16.mxu0 0
    %143 = vmatpush1.bf16.msra.mxu0 0
    %144 = vmatprep.subr.bf16.mxu0 0
    %145 = vmatpush1.bf16.msra.mxu0 %v127
    %146 = vmatprep.subr.bf16.mxu0 0
    %147 = vmatpush1.bf16.msra.mxu0 %v126
    %148 = vmatprep.subr.bf16.mxu0 0
    %149 = vmatpush1.bf16.msra.mxu0 %v125
    %150 = vmatprep.subr.bf16.mxu0 0
    %151 = vmatpush1.bf16.msra.mxu0 %v124
    %152 = vmatprep.subr.bf16.mxu0 0
    %153 = vmatpush2.bf16.msra.mxu0 0
    %154 = vmatprep.subr.bf16.mxu0 0
    %155 = vmatpush2.bf16.msra.mxu0 0
    %156 = vmatprep.subr.bf16.mxu0 0
    %157 = vmatpush2.bf16.msra.mxu0 0
    %158 = vmatprep.subr.bf16.mxu0 0
    %159 = vmatpush2.bf16.msra.mxu0 0
    %160 = vmatprep.subr.bf16.mxu0 0
    %161 = vmatpush2.bf16.msra.mxu0 0
    %162 = vmatprep.subr.bf16.mxu0 0
    %163 = vmatpush2.bf16.msra.mxu0 0
    %164 = vmatprep.subr.bf16.mxu0 0
    %165 = vmatpush2.bf16.msra.mxu0 0
    %166 = vmatprep.subr.bf16.mxu0 0
    %167 = vmatpush2.bf16.msra.mxu0 0
    %168 = vmatprep.mubr.bf16.mxu0 0
    %169 = vmatmul.mubr.bf16.gmra.mxu0 %v134
    %v170 = vpop.f32.mrf.mxu0
    %v171 = vadd.f32 %v106, %v170
    %v172 = vpop.f32.mrf.mxu0
    %v173 = vpop.f32.mrf.mxu0
    %v174 = vpop.f32.mrf.mxu0
    %175 = vdwg.mxu0
    %vm176 = vcmask 64512
    %177 = vst.msk [vmem:[#allocation2] sm:$0xff] %vm176, %v171
    // Predicated region
    $region22: #{tpu_custom_call.1} parent=1 // pred_check
      _
    $region23: #{tpu_custom_call.1} parent=1 // pred_check_branch
      %179 = sbr.rel (0) target = $region25
    $region24: #{tpu_custom_call.1} parent=1 // pred_region
      %s181 = ssub.s32 128, 128
      %182 = vsyncadd [#allocation3], %s181
      %s184 = sshll.u32 [#allocation2], 4
      %s185 = int_to_ptr.vmem [resolvable:$true] %s184
      %187 = dma.vmem_to_hbm [thread:$0]  %s185, 128, %s5, [#allocation3]
    $region25: #{tpu_custom_call.1} parent=1 // pred_fallthru
      _
    // Predicated region
    $region26: #{tpu_custom_call.1} parent=1 // pred_check
      _
    $region27: #{tpu_custom_call.1} parent=1 // pred_check_branch
      %189 = sbr.rel (0) target = $region29
    $region28: #{tpu_custom_call.1} parent=1 // pred_region
      %190 = dma.done [#allocation3], 128
    $region29: #{tpu_custom_call.1} parent=1 // pred_fallthru
      _
    %191 = vsyncpa [#allocation3], 1

</llo_original>
